<compile_context>
chip_gen: v7x
topology: tpu7x:2x2x1
jax: 0.10.0
libtpu: 0.0.40
codegen_flags: <defaults>
</compile_context>

<pallas_src>
import functools
import math

import jax
import jax.numpy as jnp
from jax.experimental import pallas as pl
from jax.experimental.pallas import tpu as pltpu


def make_pos_embedding(emb_size: int, maxlen: int = 5000, dtype=jnp.float32):
    """Replicates the buffer built in PositionalEncoding.__init__ (shape (maxlen, E))."""
    den = jnp.exp(
        -jnp.arange(0, emb_size, 2, dtype=jnp.float32) * math.log(10000.0) / emb_size
    )
    pos = jnp.arange(0, maxlen, dtype=jnp.float32).reshape(maxlen, 1)
    pe = jnp.zeros((maxlen, emb_size), jnp.float32)
    pe = pe.at[:, 0::2].set(jnp.sin(pos * den))
    pe = pe.at[:, 1::2].set(jnp.cos(pos * den))
    return pe.astype(dtype)


def _pe_kernel(*refs, dropout_rate: float, apply_dropout: bool):
    """Flat 2-D tile: (ts, B*E).  y = x + pos, then optional inverted dropout."""
    if apply_dropout:
        x_ref, pos_ref, rnd_ref, o_ref = refs
    else:
        x_ref, pos_ref, o_ref = refs

    # Same-dtype add (no f32 upcast): pos is already stored in the embedding
    # dtype, and bf16 adds run natively on the VPU (v6e/v7x).
    y = x_ref[...] + pos_ref[...]

    if apply_dropout:
        if dropout_rate >= 1.0:
            # Degenerate case: drop everything (avoids 1/(1-p) divide-by-zero).
            o_ref[...] = jnp.zeros_like(y)
            return
        scale = 1.0 / (1.0 - dropout_rate)
        keep = rnd_ref[...] >= jnp.float32(dropout_rate)
        # Fused mask: (keep ? scale : 0) in the embedding dtype -> one multiply.
        mask = keep.astype(y.dtype) * jnp.asarray(scale, y.dtype)
        o_ref[...] = y * mask
    else:
        o_ref[...] = y


def _choose_seq_tile(seq_len: int, row_bytes: int, target_bytes: int = 2 << 20) -> int:
    """Largest divisor of seq_len (multiple of 8, or seq_len itself) with a
    tile <= ~2 MiB.  Keeps double-buffered VMEM use well under v7x's budget
    while giving the pipeline multiple grid steps on realistic shapes."""
    cands = [
        d for d in range(1, seq_len + 1)
        if seq_len % d == 0 and (d % 8 == 0 or d == seq_len)
    ]
    fitting = [d for d in cands if d * row_bytes <= target_bytes]
    return max(fitting) if fitting else min(cands)


def positional_encoding(
    token_embedding,
    pos_table,
    *,
    dropout_rate: float,
    deterministic: bool = True,
    seed: int = 0,
    seq_tile: int | None = None,
):
    """Forward pass of PositionalEncoding.

    token_embedding: (S, B, E)
    pos_table:       (maxlen, E), maxlen >= S
    deterministic=True  -> eval-mode dropout (identity), matches module.eval()
    deterministic=False -> inverted dropout (train mode).
    """
    S, B, E = token_embedding.shape
    if pos_table.shape[0] < S:
        raise ValueError(
            f"pos_table maxlen ({pos_table.shape[0]}) must be >= seq_len ({S})"
        )
    if pos_table.shape[1] != E:
        raise ValueError("pos_table emb_size mismatch")

    dtype = token_embedding.dtype
    BE = B * E

    # Lane-dense layout: (S, B, E) -> (S, B*E) is a free row-major view.
    x_flat = token_embedding.reshape(S, BE)
    # pos broadcast over batch == self.pos_embedding[:S].unsqueeze(-2); after
    # flattening (b, e) -> b*E + e this is a tile along the batch axis.
    pos = pos_table[:S].astype(dtype)
    pos_flat = jnp.tile(pos, (1, B))  # (S, B*E)

    row_bytes = BE * jnp.dtype(dtype).itemsize
    ts = _choose_seq_tile(S, row_bytes) if seq_tile is None else int(seq_tile)
    if S % ts != 0:
        raise ValueError(f"seq_tile ({ts}) must divide seq_len ({S})")

    apply_dropout = (not deterministic) and float(dropout_rate) > 0.0

    idx = lambda i: (i, 0)
    in_arrays = [x_flat, pos_flat]
    in_specs = [
        pl.BlockSpec((ts, BE), idx),
        pl.BlockSpec((ts, BE), idx),
    ]
    if apply_dropout:
        rnd = jax.random.uniform(jax.random.PRNGKey(seed), (S, BE), dtype=jnp.float32)
        in_arrays.append(rnd)
        in_specs.append(pl.BlockSpec((ts, BE), idx))

    kernel = functools.partial(
        _pe_kernel,
        dropout_rate=float(dropout_rate),
        apply_dropout=apply_dropout,
    )

    out_flat = pl.pallas_call(
        kernel,
        out_shape=jax.ShapeDtypeStruct((S, BE), dtype),
        grid=(S // ts,),
        in_specs=in_specs,
        out_specs=pl.BlockSpec((ts, BE), idx),
        # Each output tile is written exactly once -> safe to shard across
        # TensorCores (v7x megacore); neutral on single-TC v5e/v6e.
        compiler_params=pltpu.CompilerParams(dimension_semantics=("parallel",)),
    )(*in_arrays)

    return out_flat.reshape(S, B, E)


if __name__ == "__main__":
    # Small shapes consistent with the module's forward: (seq, batch, emb).
    S, B, E = 8, 2, 32
    MAXLEN = 64
    DROPOUT = 0.1

    key = jax.random.PRNGKey(0)
    x = jax.random.normal(key, (S, B, E), dtype=jnp.float32)

    pos_table = make_pos_embedding(E, maxlen=MAXLEN)
    ref = x + pos_table[:S][:, None, :]

    # Eval-mode (deterministic) forward — matches module.eval() exactly.
    out = positional_encoding(x, pos_table, dropout_rate=DROPOUT, deterministic=True)
    out = jax.block_until_ready(out)
    assert out.shape == (S, B, E)
    assert jnp.allclose(out, ref, atol=1e-6, rtol=1e-6), "mismatch vs reference"

    # Training-mode forward (inverted dropout): every element must be either 0
    # or the reference value scaled by 1/(1-p).
    out_train = positional_encoding(
        x, pos_table, dropout_rate=DROPOUT, deterministic=False, seed=123
    )
    out_train = jax.block_until_ready(out_train)
    assert out_train.shape == (S, B, E)
    scale = 1.0 / (1.0 - DROPOUT)
    ok = jnp.isclose(out_train, 0.0, atol=1e-6) | jnp.isclose(
        out_train, ref * scale, rtol=1e-5, atol=1e-5
    )
    assert bool(jnp.all(ok)), "training-mode output is not a valid dropout of the reference"

    print("KERNEL_OK")
</pallas_src>

<mosaic_0001>
module attributes {stable_mosaic.version = 11 : i64} {
  func.func @_pe_kernel(%arg0: i32, %arg1: memref<8x64xf32, #tpu.memory_space<vmem>>, %arg2: memref<8x64xf32, #tpu.memory_space<vmem>>, %arg3: memref<8x64xf32, #tpu.memory_space<vmem>>) attributes {dimension_semantics = [#tpu.dimension_semantics<parallel>], iteration_bounds = array<i64: 1>, scalar_prefetch = 0 : i64, scratch_operands = 0 : i64, tpu.core_type = #tpu.core_type<tc>, window_params = [{transform_indices = @transform_0, window_bounds = array<i64: 8, 64>}, {transform_indices = @transform_1, window_bounds = array<i64: 8, 64>}, {transform_indices = @transform_2, window_bounds = array<i64: 8, 64>}]} {
    %c0 = arith.constant 0 : index
    %c0_0 = arith.constant 0 : index
    %0 = vector.load %arg1[%c0, %c0_0] : memref<8x64xf32, #tpu.memory_space<vmem>>, vector<8x64xf32>
    %c0_1 = arith.constant 0 : index
    %c0_2 = arith.constant 0 : index
    %1 = vector.load %arg2[%c0_1, %c0_2] : memref<8x64xf32, #tpu.memory_space<vmem>>, vector<8x64xf32>
    %2 = arith.addf %0, %1 : vector<8x64xf32>
    %c0_3 = arith.constant 0 : index
    %c0_4 = arith.constant 0 : index
    %3 = vector.load %arg3[%c0_3, %c0_4] : memref<8x64xf32, #tpu.memory_space<vmem>>, vector<8x64xf32>
    tpu.vector_store %arg3[%c0_3, %c0_4], %2 {strides = array<i32>} : memref<8x64xf32, #tpu.memory_space<vmem>>, vector<8x64xf32>,
    return
  }
  func.func @transform_0(%arg0: i32) -> (i32, i32) {
    %c0_i32 = arith.constant 0 : i32
    %c0_i32_0 = arith.constant 0 : i32
    return %arg0, %c0_i32 : i32, i32
  }
  func.func @transform_1(%arg0: i32) -> (i32, i32) {
    %c0_i32 = arith.constant 0 : i32
    %c0_i32_0 = arith.constant 0 : i32
    return %arg0, %c0_i32 : i32, i32
  }
  func.func @transform_2(%arg0: i32) -> (i32, i32) {
    %c0_i32 = arith.constant 0 : i32
    %c0_i32_0 = arith.constant 0 : i32
    return %arg0, %c0_i32 : i32, i32
  }
}

</mosaic_0001>

<llo_original>
// kernel: tpu_custom_call.1
$region0: #{tpu_custom_call.1}
  #allocation0 [shape = 'u32[]', space=smem, size = 0x4, offset = 0x4, fixed_abs, tag = 'smem constant byte address 0x4 - core index']
  #allocation1 [shape = 'u32[144,128]{1,0:T(1,128)}', space=vmem, size = 0x12000, scoped, tag = 'internal scratch']
  %s0 = inlined_call_operand.hbm [shape: f32[8,64], index: 0, kind: input, shape index: {}]
  %s1 = inlined_call_operand.hbm [shape: f32[8,64], index: 1, kind: input, shape index: {}]
  %s2 = inlined_call_operand.hbm [shape: f32[8,64], index: 2, kind: output, shape index: {}]
  %s3 = sld [smem:[#allocation0]]
  $region26: #{tpu_custom_call.1} parent=0
    _
  %s5 = ssub.s32 1, %s3
  %s6 = scalar_select 0, %s5, %s3
  $region1: #{tpu_custom_call.1} parent=0
    #allocation2 [shape = 'u8[4096]{0}', space=vmem, size = 0x1000, scoped, tag = 'input window, operand 0, single buffered']
    #allocation3 [shape = 's32[1]{0}', space=sflag, size = 0x4, scoped, tag = 'scoped memory for tpu_custom_call.1']
    #allocation4 [shape = 's32[1]{0}', space=sflag, size = 0x4, scoped, tag = 'scoped memory for tpu_custom_call.1']
    #allocation5 [shape = 'u8[4096]{0}', space=vmem, size = 0x1000, scoped, tag = 'input window, operand 1, single buffered']
    #allocation6 [shape = 's32[1]{0}', space=sflag, size = 0x4, scoped, tag = 'scoped memory for tpu_custom_call.1']
    #allocation7 [shape = 'u8[4096]{0}', space=vmem, size = 0x1000, scoped, tag = 'output window, operand 0, single buffered']
    %7 = vsyncpa [#allocation3], 0
    %8 = vsyncpa [#allocation6], 0
    %9 = vsyncpa [#allocation4], 0
    // Predicated region
    $region2: #{tpu_custom_call.1} parent=1 // pred_check
      _
    $region3: #{tpu_custom_call.1} parent=1 // pred_check_branch
      %11 = sbr.rel (0) target = $region5
    $region4: #{tpu_custom_call.1} parent=1 // pred_region
      %s13 = ssub.s32 128, 128
      %14 = vsyncadd [#allocation3], %s13
      %s16 = sshll.u32 [#allocation2], 4
      %s17 = int_to_ptr.vmem [resolvable:$true] %s16
      %19 = dma.hbm_to_vmem [thread:$0]  %s0, 128, %s17, [#allocation3]
    $region5: #{tpu_custom_call.1} parent=1 // pred_fallthru
      _
    // Predicated region
    $region6: #{tpu_custom_call.1} parent=1 // pred_check
      _
    $region7: #{tpu_custom_call.1} parent=1 // pred_check_branch
      %21 = sbr.rel (0) target = $region9
    $region8: #{tpu_custom_call.1} parent=1 // pred_region
      %s23 = ssub.s32 128, 128
      %24 = vsyncadd [#allocation6], %s23
      %s26 = sshll.u32 [#allocation5], 4
      %s27 = int_to_ptr.vmem [resolvable:$true] %s26
      %29 = dma.hbm_to_vmem [thread:$0]  %s1, 128, %s27, [#allocation6]
    $region9: #{tpu_custom_call.1} parent=1 // pred_fallthru
      _
    // Predicated region
    $region10: #{tpu_custom_call.1} parent=1 // pred_check
      _
    $region11: #{tpu_custom_call.1} parent=1 // pred_check_branch
      %31 = sbr.rel (0) target = $region13
    $region12: #{tpu_custom_call.1} parent=1 // pred_region
      %32 = dma.done [#allocation3], 128
    $region13: #{tpu_custom_call.1} parent=1 // pred_fallthru
      _
    // Predicated region
    $region14: #{tpu_custom_call.1} parent=1 // pred_check
      _
    $region15: #{tpu_custom_call.1} parent=1 // pred_check_branch
      %34 = sbr.rel (0) target = $region17
    $region16: #{tpu_custom_call.1} parent=1 // pred_region
      %35 = dma.done [#allocation6], 128
    $region17: #{tpu_custom_call.1} parent=1 // pred_fallthru
      _
    %v36 = vld [vmem:[#allocation2] sm:$0xff]
    %v37 = vld [vmem:[#allocation5] sm:$0xff]
    %v38 = vadd.f32 %v36, %v37
    %vm39 = vcmask 523264
    %40 = vst.msk [vmem:[#allocation7] sm:$0xff] %vm39, %v38
    // Predicated region
    $region18: #{tpu_custom_call.1} parent=1 // pred_check
      _
    $region19: #{tpu_custom_call.1} parent=1 // pred_check_branch
      %42 = sbr.rel (0) target = $region21
    $region20: #{tpu_custom_call.1} parent=1 // pred_region
      %s44 = ssub.s32 128, 128
      %45 = vsyncadd [#allocation4], %s44
      %s47 = sshll.u32 [#allocation7], 4
      %s48 = int_to_ptr.vmem [resolvable:$true] %s47
      %50 = dma.vmem_to_hbm [thread:$0]  %s48, 128, %s2, [#allocation4]
    $region21: #{tpu_custom_call.1} parent=1 // pred_fallthru
      _
    // Predicated region
    $region22: #{tpu_custom_call.1} parent=1 // pred_check
      _
    $region23: #{tpu_custom_call.1} parent=1 // pred_check_branch
      %52 = sbr.rel (0) target = $region25
    $region24: #{tpu_custom_call.1} parent=1 // pred_region
      %53 = dma.done [#allocation4], 128
    $region25: #{tpu_custom_call.1} parent=1 // pred_fallthru
      _
    %54 = vsyncpa [#allocation3], 1
    %55 = vsyncpa [#allocation6], 1
    %56 = vsyncpa [#allocation4], 1

</llo_original>
